<compile_context>
chip_gen: v5e
topology: v5e:2x2
jax: 0.10.0
libtpu: 0.0.40
codegen_flags: <defaults>
</compile_context>

<pallas_src>
import functools

import jax
import jax.numpy as jnp
from jax.experimental import pallas as pl
from jax.experimental.pallas import tpu as pltpu

F32 = jnp.float32
KERNEL = 3          # NextItNet conv kernel size
LN_EPS = 1e-5


# ------------------------- tiling helpers -------------------------

def _sublane_align(dtype):
    """Sublane alignment for the second-to-last block dim: 8 for 4-byte,
    16 for 2-byte (bf16), 32 for 1-byte (int8/fp8)."""
    return {4: 8, 2: 16, 1: 32}.get(jnp.dtype(dtype).itemsize, 8)


def _pick_tile(dim, target, align):
    """Largest tile <= target that divides `dim` and is a multiple of `align`;
    falls back to the full dim (always a legal block).
    # TODO(synk): for large prime-ish dims the fallback is one huge block —
    # pad the operand or raise vmem_limit_bytes if that ever bites."""
    if dim <= target:
        return dim
    t = (target // align) * align
    while t >= align:
        if dim % t == 0:
            return t
        t -= align
    return dim


def _ln_math(x_f32, g_ref, b_ref, eps):
    mu = jnp.mean(x_f32, axis=-1, keepdims=True)
    var = jnp.mean(jnp.square(x_f32 - mu), axis=-1, keepdims=True)
    y = (x_f32 - mu) * jax.lax.rsqrt(var + eps)
    return y * g_ref[...].astype(F32) + b_ref[...].astype(F32)


# ------------------------- matmul (+ bias, + optional relu) -------------------------

def _matmul_bias_kernel(x_ref, w_ref, b_ref, o_ref, acc_ref, *, activation):
    @pl.when(pl.program_id(2) == 0)
    def _():
        acc_ref[...] = jnp.zeros_like(acc_ref)

    acc_ref[...] += jnp.dot(x_ref[...], w_ref[...], preferred_element_type=F32)

    @pl.when(pl.program_id(2) == pl.num_programs(2) - 1)
    def _():
        y = acc_ref[...] + b_ref[...].astype(F32)
        if activation == "relu":
            y = jnp.maximum(y, 0.0)
        o_ref[...] = y.astype(o_ref.dtype)


def matmul_bias(x, w, b, activation=None):
    """(M,K) @ (K,N) + (N,) [optional ReLU], tiled + pipelined."""
    M, K = x.shape
    _, N = w.shape
    tm = _pick_tile(M, 512, _sublane_align(x.dtype))
    tn = _pick_tile(N, 512, 128)
    tk = _pick_tile(K, 512, 128)
    return pl.pallas_call(
        functools.partial(_matmul_bias_kernel, activation=activation),
        out_shape=jax.ShapeDtypeStruct((M, N), x.dtype),
        grid=(M // tm, N // tn, K // tk),
        in_specs=[
            pl.BlockSpec((tm, tk), lambda i, j, k: (i, k)),
            pl.BlockSpec((tk, tn), lambda i, j, k: (k, j)),
            pl.BlockSpec((1, tn), lambda i, j, k: (0, j)),
        ],
        out_specs=pl.BlockSpec((tm, tn), lambda i, j, k: (i, j)),
        scratch_shapes=[pltpu.VMEM((tm, tn), F32)],
        compiler_params=pltpu.CompilerParams(
            dimension_semantics=("parallel", "parallel", "arbitrary")),
    )(x, w, b.reshape(1, N))


# ------------------------- matmul with residual + LayerNorm epilogue -------------------------

def _matmul_res_ln_kernel(x_ref, w_ref, b_ref, r_ref, g_ref, be_ref, o_ref,
                          acc_ref, *, eps):
    @pl.when(pl.program_id(1) == 0)
    def _():
        acc_ref[...] = jnp.zeros_like(acc_ref)

    acc_ref[...] += jnp.dot(x_ref[...], w_ref[...], preferred_element_type=F32)

    @pl.when(pl.program_id(1) == pl.num_programs(1) - 1)
    def _():
        y = acc_ref[...] + b_ref[...].astype(F32) + r_ref[...].astype(F32)
        o_ref[...] = _ln_math(y, g_ref, be_ref, eps).astype(o_ref.dtype)


def matmul_res_ln(x, w, b, residual, gamma, beta, eps=LN_EPS):
    """LN(residual + x @ w + b) in one kernel (N = LN feature dim kept whole)."""
    M, K = x.shape
    _, N = w.shape
    tm = _pick_tile(M, 512, _sublane_align(x.dtype))
    tk = _pick_tile(K, 512, 128)
    return pl.pallas_call(
        functools.partial(_matmul_res_ln_kernel, eps=eps),
        out_shape=jax.ShapeDtypeStruct((M, N), x.dtype),
        grid=(M // tm, K // tk),
        in_specs=[
            pl.BlockSpec((tm, tk), lambda i, k: (i, k)),
            pl.BlockSpec((tk, N), lambda i, k: (k, 0)),
            pl.BlockSpec((1, N), lambda i, k: (0, 0)),
            pl.BlockSpec((tm, N), lambda i, k: (i, 0)),
            pl.BlockSpec((1, N), lambda i, k: (0, 0)),
            pl.BlockSpec((1, N), lambda i, k: (0, 0)),
        ],
        out_specs=pl.BlockSpec((tm, N), lambda i, k: (i, 0)),
        scratch_shapes=[pltpu.VMEM((tm, N), F32)],
        compiler_params=pltpu.CompilerParams(
            dimension_semantics=("parallel", "arbitrary")),
    )(x, w, b.reshape(1, N), residual, gamma.reshape(1, N), beta.reshape(1, N))


# ------------------------- fused FFN (two matmuls) + residual + LayerNorm -------------------------

def _ffn_res_ln_kernel(x_ref, w1_ref, b1_ref, w2_ref, b2_ref, g_ref, be_ref,
                       o_ref, acc_ref, *, eps):
    @pl.when(pl.program_id(1) == 0)
    def _():
        acc_ref[...] = jnp.zeros_like(acc_ref)

    # First matmul column-chunk (full-D contraction) + bias + ReLU: the
    # intermediate never leaves VMEM/registers.
    h = jnp.dot(x_ref[...], w1_ref[...], preferred_element_type=F32)
    h = jnp.maximum(h + b1_ref[...].astype(F32), 0.0)
    # Second matmul: K-tiled over d_layer into the f32 accumulator.
    acc_ref[...] += jnp.dot(h.astype(w2_ref.dtype), w2_ref[...],
                            preferred_element_type=F32)

    @pl.when(pl.program_id(1) == pl.num_programs(1) - 1)
    def _():
        y = acc_ref[...] + b2_ref[...].astype(F32) + x_ref[...].astype(F32)
        o_ref[...] = _ln_math(y, g_ref, be_ref, eps).astype(o_ref.dtype)


def ffn_res_ln(x, w1, b1, w2, b2, gamma, beta, eps=LN_EPS):
    """LN(x + relu(x @ w1 + b1) @ w2 + b2) in a single pallas_call."""
    M, D = x.shape
    _, F = w1.shape
    tm = _pick_tile(M, 256, _sublane_align(x.dtype))
    tf = _pick_tile(F, 512, 128)
    return pl.pallas_call(
        functools.partial(_ffn_res_ln_kernel, eps=eps),
        out_shape=jax.ShapeDtypeStruct((M, D), x.dtype),
        grid=(M // tm, F // tf),
        in_specs=[
            pl.BlockSpec((tm, D), lambda i, j: (i, 0)),
            pl.BlockSpec((D, tf), lambda i, j: (0, j)),
            pl.BlockSpec((1, tf), lambda i, j: (0, j)),
            pl.BlockSpec((tf, D), lambda i, j: (j, 0)),
            pl.BlockSpec((1, D), lambda i, j: (0, 0)),
            pl.BlockSpec((1, D), lambda i, j: (0, 0)),
            pl.BlockSpec((1, D), lambda i, j: (0, 0)),
        ],
        out_specs=pl.BlockSpec((tm, D), lambda i, j: (i, 0)),
        scratch_shapes=[pltpu.VMEM((tm, D), F32)],
        compiler_params=pltpu.CompilerParams(
            dimension_semantics=("parallel", "arbitrary")),
    )(x, w1, b1.reshape(1, F), w2, b2.reshape(1, D),
      gamma.reshape(1, D), beta.reshape(1, D))


# ------------------------- causal multi-head attention -------------------------

def _mha_kernel(q_ref, kv_ref, o_ref, *, heads, scale, causal, q_tile):
    qblk = q_ref[0]                     # (tq, 3D) — this query tile's Q/K/V rows
    kvblk = kv_ref[0]                   # (L, 3D)  — full-sequence K/V (resident)
    tq = qblk.shape[0]
    D = qblk.shape[1] // 3
    Dh = D // heads
    L = kvblk.shape[0]

    if causal:
        q0 = pl.program_id(1) * q_tile
        row = q0 + jax.lax.broadcasted_iota(jnp.int32, (tq, L), 0)
        col = jax.lax.broadcasted_iota(jnp.int32, (tq, L), 1)
        mask = col <= row

    # Per-head 2-D dots, outputs written straight into o_ref lane slices
    # (no concatenate, no in-kernel head transposes).  Batching heads into one
    # dot_general would not deepen the MXU K dim (still Dh per head).
    for h in range(heads):
        qh = qblk[:, h * Dh:(h + 1) * Dh]
        kh = kvblk[:, D + h * Dh:D + (h + 1) * Dh]
        vh = kvblk[:, 2 * D + h * Dh:2 * D + (h + 1) * Dh]
        # contract last dims directly: no explicit k.T (saves an XLU transpose)
        s = jax.lax.dot_general(qh, kh, (((1,), (1,)), ((), ())),
                                preferred_element_type=F32) * scale
        if causal:
            s = jnp.where(mask, s, -1e30)
        m = jnp.max(s, axis=-1, keepdims=True)
        p = jnp.exp(s - m)                          # unnormalized, f32
        l = jnp.sum(p, axis=-1, keepdims=True)
        oh = jnp.dot(p.astype(vh.dtype), vh, preferred_element_type=F32)
        oh = oh * (1.0 / l)                         # exact; only O(tq) divides
        o_ref[0, :, h * Dh:(h + 1) * Dh] = oh.astype(o_ref.dtype)


def multihead_attention(qkv, heads, causal=True):
    """qkv: (B, L, 3*D) fused projections -> (B, L, D).
    Grid (B, L/tq): query tiles bound the score block to (tq, L) and give the
    two v7x TensorCores a second parallel axis.
    # TODO(synk): for very long L, make KV a grid axis with an online-softmax
    # accumulator (flash-style) so VMEM stays O(tq*Dh)."""
    B, L, D3 = qkv.shape
    D = D3 // 3
    Dh = D // heads
    scale = 1.0 / float(Dh) ** 0.5
    tq = _pick_tile(L, 512, _sublane_align(qkv.dtype))
    return pl.pallas_call(
        functools.partial(_mha_kernel, heads=heads, scale=scale, causal=causal,
                          q_tile=tq),
        out_shape=jax.ShapeDtypeStruct((B, L, D), qkv.dtype),
        grid=(B, L // tq),
        in_specs=[
            pl.BlockSpec((1, tq, D3), lambda b, qi: (b, qi, 0)),   # query tile
            pl.BlockSpec((1, L, D3), lambda b, qi: (b, 0, 0)),     # resident K/V
        ],
        out_specs=pl.BlockSpec((1, tq, D), lambda b, qi: (b, qi, 0)),
        compiler_params=pltpu.CompilerParams(
            dimension_semantics=("parallel", "parallel")),
    )(qkv, qkv)


# ------------------------- dilated causal conv + fused LN/ReLU/residual -------------------------

def _conv_im2col_ln(x, col_ref, w_ref, b_ref, g_ref, be_ref, *, dilation,
                    kernel, eps, activation):
    L, Cin = x.shape
    # Assemble the causal im2col tile once in VMEM (zero rows = causal left
    # pad, so no padded copy of x is ever materialized in HBM), then run ONE
    # (L, K*Cin) @ (K*Cin, Cout) MXU dot instead of K shallow-K dots.
    for t in range(kernel):
        shift = (kernel - 1 - t) * dilation          # static per tap
        cols = slice(t * Cin, (t + 1) * Cin)
        if shift == 0:
            col_ref[:, cols] = x
        elif shift >= L:
            col_ref[:, cols] = jnp.zeros((L, Cin), x.dtype)
        else:
            col_ref[:shift, cols] = jnp.zeros((shift, Cin), x.dtype)
            col_ref[shift:, cols] = x[:L - shift, :]
    y = jnp.dot(col_ref[...], w_ref[...], preferred_element_type=F32)
    y = y + b_ref[...].astype(F32)
    y = _ln_math(y, g_ref, be_ref, eps)
    if activation == "relu":
        y = jnp.maximum(y, 0.0)
    return y


def _conv_ln_kernel(x_ref, w_ref, b_ref, g_ref, be_ref, o_ref, col_ref, **kw):
    y = _conv_im2col_ln(x_ref[0], col_ref, w_ref, b_ref, g_ref, be_ref, **kw)
    o_ref[0] = y.astype(o_ref.dtype)


def _conv_ln_res_kernel(x_ref, r_ref, w_ref, b_ref, g_ref, be_ref, o_ref,
                        col_ref, **kw):
    y = _conv_im2col_ln(x_ref[0], col_ref, w_ref, b_ref, g_ref, be_ref, **kw)
    o_ref[0] = (r_ref[0].astype(F32) + y).astype(o_ref.dtype)


def causal_conv_ln(x, w, b, gamma, beta, dilation, activation=None,
                   residual=None, eps=LN_EPS):
    """Dilated causal conv (kernel=3) fused with LayerNorm (+optional ReLU and
    post-residual add).  Weight rows are [tap0(oldest)..tapK-1(current)] x Cin —
    NOT the PyTorch Conv1d layout (permute when porting weights).
    # TODO(synk): tile L with a (KERNEL-1)*dilation halo for very long sequences."""
    B, L, Cin = x.shape
    Cout = w.shape[1]
    kw = dict(dilation=dilation, kernel=KERNEL, eps=eps, activation=activation)
    x_spec = pl.BlockSpec((1, L, Cin), lambda bb: (bb, 0, 0))
    w_spec = pl.BlockSpec((KERNEL * Cin, Cout), lambda bb: (0, 0))
    vec_spec = lambda: pl.BlockSpec((1, Cout), lambda bb: (0, 0))
    o_spec = pl.BlockSpec((1, L, Cout), lambda bb: (bb, 0, 0))

    if residual is None:
        kern = functools.partial(_conv_ln_kernel, **kw)
        in_specs = [x_spec, w_spec, vec_spec(), vec_spec(), vec_spec()]
        args = (x, w, b.reshape(1, Cout), gamma.reshape(1, Cout),
                beta.reshape(1, Cout))
    else:
        kern = functools.partial(_conv_ln_res_kernel, **kw)
        r_spec = pl.BlockSpec((1, L, Cout), lambda bb: (bb, 0, 0))
        in_specs = [x_spec, r_spec, w_spec, vec_spec(), vec_spec(), vec_spec()]
        args = (x, residual, w, b.reshape(1, Cout), gamma.reshape(1, Cout),
                beta.reshape(1, Cout))

    return pl.pallas_call(
        kern,
        out_shape=jax.ShapeDtypeStruct((B, L, Cout), x.dtype),
        grid=(B,),
        in_specs=in_specs,
        out_specs=o_spec,
        scratch_shapes=[pltpu.VMEM((L, KERNEL * Cin), x.dtype)],
        compiler_params=pltpu.CompilerParams(dimension_semantics=("parallel",)),
    )(*args)


# ------------------------- parameter init (deterministic) -------------------------

def _dense_params(key, din, dout):
    kw, kb = jax.random.split(key)
    scale = 1.0 / (din ** 0.5)
    return {
        "w": jax.random.uniform(kw, (din, dout), F32, -scale, scale),
        "b": jax.random.uniform(kb, (dout,), F32, -scale, scale),
    }


def init_transformer_block(key, d_layer, d_model, heads):
    ks = jax.random.split(key, 4)
    return {
        "kind": "transformer",
        "heads": heads,
        "wqkv": _dense_params(ks[0], d_model, 3 * d_model),   # fused Q/K/V
        "wo": _dense_params(ks[1], d_model, d_model),
        "ff1": _dense_params(ks[2], d_model, d_layer),
        "ff2": _dense_params(ks[3], d_layer, d_model),
        "ln1_g": jnp.ones((d_model,), F32), "ln1_b": jnp.zeros((d_model,), F32),
        "ln2_g": jnp.ones((d_model,), F32), "ln2_b": jnp.zeros((d_model,), F32),
    }


def init_nextitnet_block(key, d_layer, d_model, dilation):
    k1, k2 = jax.random.split(key)
    return {
        "kind": "nextitnet",
        "dilation": dilation,
        "conv1": _dense_params(k1, KERNEL * d_model, d_layer),   # im2col layout
        "conv2": _dense_params(k2, KERNEL * d_layer, d_model),
        "ln1_g": jnp.ones((d_layer,), F32), "ln1_b": jnp.zeros((d_layer,), F32),
        "ln2_g": jnp.ones((d_model,), F32), "ln2_b": jnp.zeros((d_model,), F32),
    }


def cast_floats(tree, dtype):
    """Cast float leaves to `dtype` (e.g. bf16 for the v6e/v7x MXU fast path).
    Kernels keep f32 accumulation and f32 LayerNorm/softmax math."""
    def cast(a):
        if isinstance(a, jnp.ndarray) and jnp.issubdtype(a.dtype, jnp.floating):
            return a.astype(dtype)
        return a
    return jax.tree_util.tree_map(cast, tree)


# ------------------------- forward passes -------------------------

def apply_transformer_block(p, x):
    B, L, D = x.shape
    H = p["heads"]
    x2 = x.reshape(B * L, D)

    # 1) fused QKV projection — one pass over x2
    qkv = matmul_bias(x2, p["wqkv"]["w"], p["wqkv"]["b"])              # (B*L, 3D)
    # 2) causal multi-head attention (query-tiled)
    attn = multihead_attention(qkv.reshape(B, L, 3 * D), H, causal=True)
    # 3) output projection with residual + LayerNorm fused in the epilogue
    h = matmul_res_ln(attn.reshape(B * L, D), p["wo"]["w"], p["wo"]["b"],
                      residual=x2, gamma=p["ln1_g"], beta=p["ln1_b"])  # LN(x + attn@wo)
    # 4) both FFN matmuls + residual + LayerNorm in a single pallas_call
    out = ffn_res_ln(h, p["ff1"]["w"], p["ff1"]["b"],
                     p["ff2"]["w"], p["ff2"]["b"],
                     p["ln2_g"], p["ln2_b"])                           # LN(h + ffn(h))
    return out.reshape(B, L, D)


def apply_nextitnet_block(p, x):
    dil = p["dilation"]
    # conv1 -> relu(LN1(.)) fused
    h = causal_conv_ln(x, p["conv1"]["w"], p["conv1"]["b"],
                       p["ln1_g"], p["ln1_b"], dil, activation="relu")
    # conv2 -> x + relu(LN2(.)) fused
    out = causal_conv_ln(h, p["conv2"]["w"], p["conv2"]["b"],
                         p["ln2_g"], p["ln2_b"], 2 * dil,
                         activation="relu", residual=x)
    return out


# ------------------------- MixOp / Block -------------------------

def init_mixop(key, d_model, setting):
    attn_heads, dilations, d_layer = setting
    n_ops = len(attn_heads) * len(d_layer) + len(dilations) * len(d_layer)
    keys = jax.random.split(key, n_ops)
    ops, i = [], 0
    for head in attn_heads:
        for dl in d_layer:
            ops.append(init_transformer_block(keys[i], dl, d_model, head)); i += 1
    for dilation in dilations:
        for dl in d_layer:
            ops.append(init_nextitnet_block(keys[i], dl, d_model, dilation)); i += 1
    return ops


def apply_mixop(ops, x, index):
    # MixOp.forward(x, index): Python-level selection of one candidate op.
    p = ops[index]
    if p["kind"] == "transformer":
        return apply_transformer_block(p, x)
    return apply_nextitnet_block(p, x)


def init_block(key, layers, d_model, setting):
    keys = jax.random.split(key, layers)
    return [init_mixop(k, d_model, setting) for k in keys]


def apply_block(block_params, x, index_list, compute_dtype=None):
    assert len(index_list) == len(block_params)
    if compute_dtype is not None:           # e.g. jnp.bfloat16 on v6e/v7x
        x = x.astype(compute_dtype)
        block_params = cast_floats(block_params, compute_dtype)
    for layer_ops, idx in zip(block_params, index_list):
        x = apply_mixop(layer_ops, x, idx)
    return x


# ------------------------- main -------------------------

if __name__ == "__main__":
    key = jax.random.PRNGKey(0)
    kp, kx = jax.random.split(key)

    B, L, d_model = 2, 8, 32
    layers = 2
    setting = ([1, 2], [1, 2], [32, 64])   # (attn_heads, dilations, d_layer)

    block_params = init_block(kp, layers, d_model, setting)
    x = jax.random.normal(kx, (B, L, d_model), F32)

    # candidate ops per layer: 0-3 TransformerBlocks (head x d_layer),
    #                          4-7 NextItNet blocks (dilation x d_layer)
    # layer 0: transformer (heads=2, d_layer=64); layer 1: nextitnet (dil=2, d_layer=32)
    index_list = [3, 6]

    y = apply_block(block_params, x, index_list)
    jax.block_until_ready(y)
    assert y.shape == (B, L, d_model) and y.dtype == F32

    print("KERNEL_OK")
</pallas_src>

<mosaic_0001>
module attributes {stable_mosaic.version = 11 : i64} {
  func.func @_matmul_bias_kernel(%arg0: i32, %arg1: i32, %arg2: i32, %arg3: memref<16x32xf32, #tpu.memory_space<vmem>>, %arg4: memref<32x96xf32, #tpu.memory_space<vmem>>, %arg5: memref<1x96xf32, #tpu.memory_space<vmem>>, %arg6: memref<16x96xf32, #tpu.memory_space<vmem>>, %arg7: memref<16x96xf32, #tpu.memory_space<vmem>>) attributes {dimension_semantics = [#tpu.dimension_semantics<parallel>, #tpu.dimension_semantics<parallel>, #tpu.dimension_semantics<arbitrary>], iteration_bounds = array<i64: 1, 1, 1>, scalar_prefetch = 0 : i64, scratch_operands = 1 : i64, tpu.core_type = #tpu.core_type<tc>, window_params = [{transform_indices = @transform_0, window_bounds = array<i64: 16, 32>}, {transform_indices = @transform_1, window_bounds = array<i64: 32, 96>}, {transform_indices = @transform_2, window_bounds = array<i64: 1, 96>}, {transform_indices = @transform_3, window_bounds = array<i64: 16, 96>}]} {
    %c0_i32 = arith.constant 0 : i32
    %0 = arith.cmpi eq, %arg2, %c0_i32 : i32
    %1 = arith.extui %0 : i1 to i32
    %c0_i32_0 = arith.constant 0 : i32
    %2 = arith.cmpi ne, %1, %c0_i32_0 : i32
    scf.if %2 {
      %cst_10 = arith.constant 0.000000e+00 : f32
      %12 = vector.broadcast %cst_10 : f32 to vector<16x96xf32>
      %c0_11 = arith.constant 0 : index
      %c0_12 = arith.constant 0 : index
      %13 = vector.load %arg7[%c0_11, %c0_12] : memref<16x96xf32, #tpu.memory_space<vmem>>, vector<16x96xf32>
      tpu.vector_store %arg7[%c0_11, %c0_12], %12 {strides = array<i32>} : memref<16x96xf32, #tpu.memory_space<vmem>>, vector<16x96xf32>,
    } else {
    }
    %c0 = arith.constant 0 : index
    %c0_1 = arith.constant 0 : index
    %3 = vector.load %arg7[%c0, %c0_1] : memref<16x96xf32, #tpu.memory_space<vmem>>, vector<16x96xf32>
    %c0_2 = arith.constant 0 : index
    %c0_3 = arith.constant 0 : index
    %4 = vector.load %arg3[%c0_2, %c0_3] : memref<16x32xf32, #tpu.memory_space<vmem>>, vector<16x32xf32>
    %c0_4 = arith.constant 0 : index
    %c0_5 = arith.constant 0 : index
    %5 = vector.load %arg4[%c0_4, %c0_5] : memref<32x96xf32, #tpu.memory_space<vmem>>, vector<32x96xf32>
    %cst = arith.constant dense<0.000000e+00> : vector<16x96xf32>
    %6 = tpu.matmul %4, %5, %cst {dimension_numbers = #tpu.dot_dimension_numbers<[1], [0], [0], [1], [0, 0, 1, 1], [], []>} : vector<16x32xf32>, vector<32x96xf32>, vector<16x96xf32> -> vector<16x96xf32>
    %7 = arith.addf %3, %6 : vector<16x96xf32>
    %c0_6 = arith.constant 0 : index
    %c0_7 = arith.constant 0 : index
    %8 = vector.load %arg7[%c0_6, %c0_7] : memref<16x96xf32, #tpu.memory_space<vmem>>, vector<16x96xf32>
    tpu.vector_store %arg7[%c0_6, %c0_7], %7 {strides = array<i32>} : memref<16x96xf32, #tpu.memory_space<vmem>>, vector<16x96xf32>,
    %c0_i32_8 = arith.constant 0 : i32
    %9 = arith.cmpi eq, %arg2, %c0_i32_8 : i32
    %10 = arith.extui %9 : i1 to i32
    %c0_i32_9 = arith.constant 0 : i32
    %11 = arith.cmpi ne, %10, %c0_i32_9 : i32
    scf.if %11 {
      %c0_10 = arith.constant 0 : index
      %c0_11 = arith.constant 0 : index
      %12 = vector.load %arg7[%c0_10, %c0_11] : memref<16x96xf32, #tpu.memory_space<vmem>>, vector<16x96xf32>
      %c0_12 = arith.constant 0 : index
      %c0_13 = arith.constant 0 : index
      %13 = vector.load %arg5[%c0_12, %c0_13] : memref<1x96xf32, #tpu.memory_space<vmem>>, vector<1x96xf32>
      %14 = vector.broadcast %13 : vector<1x96xf32> to vector<16x96xf32>
      %15 = arith.addf %12, %14 : vector<16x96xf32>
      %c0_14 = arith.constant 0 : index
      %c0_15 = arith.constant 0 : index
      %16 = vector.load %arg6[%c0_14, %c0_15] : memref<16x96xf32, #tpu.memory_space<vmem>>, vector<16x96xf32>
      tpu.vector_store %arg6[%c0_14, %c0_15], %15 {strides = array<i32>} : memref<16x96xf32, #tpu.memory_space<vmem>>, vector<16x96xf32>,
    } else {
    }
    return
  }
  func.func @transform_0(%arg0: i32, %arg1: i32, %arg2: i32) -> (i32, i32) {
    %c0_i32 = arith.constant 0 : i32
    return %arg0, %arg2 : i32, i32
  }
  func.func @transform_1(%arg0: i32, %arg1: i32, %arg2: i32) -> (i32, i32) {
    %c0_i32 = arith.constant 0 : i32
    return %arg2, %arg1 : i32, i32
  }
  func.func @transform_2(%arg0: i32, %arg1: i32, %arg2: i32) -> (i32, i32) {
    %c0_i32 = arith.constant 0 : i32
    %c0_i32_0 = arith.constant 0 : i32
    return %c0_i32, %arg1 : i32, i32
  }
  func.func @transform_3(%arg0: i32, %arg1: i32, %arg2: i32) -> (i32, i32) {
    %c0_i32 = arith.constant 0 : i32
    return %arg0, %arg1 : i32, i32
  }
}

</mosaic_0001>

<llo_original>
// kernel: tpu_custom_call.1
$region0: #{tpu_custom_call.1}
  #allocation0 [shape = 'u32[]', space=smem, size = 0x4, offset = 0x4, fixed_abs, tag = 'smem constant byte address 0x4 - core index']
  #allocation1 [shape = 'u32[72,128]{1,0:T(1,128)}', space=vmem, size = 0x9000, scoped, tag = 'internal scratch']
  #allocation2 [shape = 'f32[16,96]{1,0:T(8,128)}', space=vmem, size = 0x2000, scoped, tag = 'scratch operand']
  %s0 = inlined_call_operand.hbm [shape: f32[16,32], index: 0, kind: input, shape index: {}]
  %s1 = inlined_call_operand.hbm [shape: f32[32,96], index: 1, kind: input, shape index: {}]
  %s2 = inlined_call_operand.vmem [shape: f32[1,96], index: 2, kind: input, shape index: {}]
  %s3 = inlined_call_operand.hbm [shape: f32[16,96], index: 3, kind: output, shape index: {}]
  %s4 = sld [smem:[#allocation0]]
  $region38: #{tpu_custom_call.1} parent=0
    _
  %s6 = ssub.s32 1, %s4
  %s7 = scalar_select 0, %s6, %s4
  $region1: #{tpu_custom_call.1} parent=0
    #allocation3 [shape = 'u8[8192]{0}', space=vmem, size = 0x2000, scoped, tag = 'input window, operand 0, single buffered']
    #allocation4 [shape = 's32[1]{0}', space=sflag, size = 0x4, scoped, tag = 'scoped memory for tpu_custom_call.1']
    #allocation5 [shape = 's32[1]{0}', space=sflag, size = 0x4, scoped, tag = 'scoped memory for tpu_custom_call.1']
    #allocation6 [shape = 'u8[16384]{0}', space=vmem, size = 0x4000, scoped, tag = 'input window, operand 1, single buffered']
    #allocation7 [shape = 's32[1]{0}', space=sflag, size = 0x4, scoped, tag = 'scoped memory for tpu_custom_call.1']
    #allocation8 [shape = 'u8[8192]{0}', space=vmem, size = 0x2000, scoped, tag = 'output window, operand 0, single buffered']
    %8 = vsyncpa [#allocation4], 0
    %9 = vsyncpa [#allocation7], 0
    %10 = vsyncpa [#allocation5], 0
    // Predicated region
    $region2: #{tpu_custom_call.1} parent=1 // pred_check
      _
    $region3: #{tpu_custom_call.1} parent=1 // pred_check_branch
      %12 = sbr.rel (0) target = $region5
    $region4: #{tpu_custom_call.1} parent=1 // pred_region
      %14 = vsyncadd [#allocation4], 0
      %s15 = sshll.u32 %s0, 4
      %s16 = int_to_ptr.hbm [resolvable:$true] %s15
      %s17 = sshll.u32 [#allocation3], 4
      %s18 = int_to_ptr.vmem [resolvable:$true] %s17
      %23 = dma.hbm_to_vmem [thread:$0]  %s16, 256, %s18, [#allocation4], 128, 128, 8
    $region5: #{tpu_custom_call.1} parent=1 // pred_fallthru
      _
    // Predicated region
    $region6: #{tpu_custom_call.1} parent=1 // pred_check
      _
    $region7: #{tpu_custom_call.1} parent=1 // pred_check_branch
      %25 = sbr.rel (0) target = $region9
    $region8: #{tpu_custom_call.1} parent=1 // pred_region
      %27 = vsyncadd [#allocation7], 0
      %s28 = sshll.u32 %s1, 4
      %s29 = int_to_ptr.hbm [resolvable:$true] %s28
      %s30 = sshll.u32 [#allocation6], 4
      %s31 = int_to_ptr.vmem [resolvable:$true] %s30
      %36 = dma.hbm_to_vmem [thread:$0]  %s29, 512, %s31, [#allocation7], 128, 128, 8
    $region9: #{tpu_custom_call.1} parent=1 // pred_fallthru
      _
    // Predicated region
    $region10: #{tpu_custom_call.1} parent=1 // pred_check
      _
    $region11: #{tpu_custom_call.1} parent=1 // pred_check_branch
      %38 = sbr.rel (0) target = $region13
    $region12: #{tpu_custom_call.1} parent=1 // pred_region
      _
    $region13: #{tpu_custom_call.1} parent=1 // pred_fallthru
      _
    // Predicated region
    $region14: #{tpu_custom_call.1} parent=1 // pred_check
      _
    $region15: #{tpu_custom_call.1} parent=1 // pred_check_branch
      %40 = sbr.rel (0) target = $region17
    $region16: #{tpu_custom_call.1} parent=1 // pred_region
      %42 = dma.done [#allocation4], 256
    $region17: #{tpu_custom_call.1} parent=1 // pred_fallthru
      _
    // Predicated region
    $region18: #{tpu_custom_call.1} parent=1 // pred_check
      _
    $region19: #{tpu_custom_call.1} parent=1 // pred_check_branch
      %44 = sbr.rel (0) target = $region21
    $region20: #{tpu_custom_call.1} parent=1 // pred_region
      %46 = dma.done [#allocation7], 512
    $region21: #{tpu_custom_call.1} parent=1 // pred_fallthru
      _
    %p47 = scmp.eq.s32.totalorder 0, 0
    // Predicated region
    $region22: #{tpu_custom_call.1} parent=1 // pred_check
      %p48 = pneg %p47
    $region23: #{tpu_custom_call.1} parent=1 // pred_check_branch
      %50 = sbr.rel (%p48) target = $region25
    $region24: #{tpu_custom_call.1} parent=1 // pred_region
      %vm51 = vcmask 785408
      %52 = vst.msk [vmem:[#allocation2] sm:$0xff] %vm51, 0.0
      %53 = vst.msk [vmem:[#allocation2 + $0x8] sm:$0xff] %vm51, 0.0
    $region25: #{tpu_custom_call.1} parent=1 // pred_fallthru
      _
    %v54 = vld [vmem:[#allocation2] sm:$0xff]
    %v55 = vld [vmem:[#allocation2 + $0x8] sm:$0xff]
    %v56 = vld [vmem:[#allocation3] sm:$0xff]
    %v57 = vld [vmem:[#allocation3 + $0x8] sm:$0xff]
    %v58 = vld [vmem:[#allocation6] sm:$0xff]
    %v59 = vld [vmem:[#allocation6 + $0x8] sm:$0xff]
    %v60 = vld [vmem:[#allocation6 + $0x10] sm:$0xff]
    %v61 = vld [vmem:[#allocation6 + $0x18] sm:$0xff]
    %vm62 = vcmask 261120
    %v64 = vsel %vm62, %v56, 0
    %v67 = vsel %vm62, %v57, 0
    %69 = vmatpush.msra.mxu0 0.0
    %70 = vmatpush.msra.mxu0 0.0
    %71 = vmatpush.msra.mxu0 0.0
    %72 = vmatpush.msra.mxu0 0.0
    %73 = vmatpush.msra.mxu0 0.0
    %74 = vmatpush.msra.mxu0 0.0
    %75 = vmatpush.msra.mxu0 0.0
    %76 = vmatpush.msra.mxu0 0.0
    %77 = vmatpush.msra.mxu0 0.0
    %78 = vmatpush.msra.mxu0 0.0
    %79 = vmatpush.msra.mxu0 0.0
    %80 = vmatpush.msra.mxu0 0.0
    %81 = vmatpush.msra.mxu0 %v61
    %82 = vmatpush.msra.mxu0 %v60
    %83 = vmatpush.msra.mxu0 %v59
    %84 = vmatpush.msra.mxu0 %v58
    %85 = vmatmul.f32.gmra.mxu0 %v64
    %v86 = vpop.f32.mrf.mxu0
    %v87 = vadd.f32 0.0, %v86
    %88 = vmatmul.f32.gmra.mxu0 %v67
    %v89 = vpop.f32.mrf.mxu0
    %v90 = vadd.f32 0.0, %v89
    %91 = vdwg.mxu0
    %v92 = vadd.f32 %v54, %v87
    %v93 = vadd.f32 %v55, %v90
    %vm94 = vcmask 785408
    %95 = vst.msk [vmem:[#allocation2] sm:$0xff] %vm94, %v92
    %96 = vst.msk [vmem:[#allocation2 + $0x8] sm:$0xff] %vm94, %v93
    // Predicated region
    $region26: #{tpu_custom_call.1} parent=1 // pred_check
      %p97 = pneg %p47
    $region27: #{tpu_custom_call.1} parent=1 // pred_check_branch
      %99 = sbr.rel (%p97) target = $region29
    $region28: #{tpu_custom_call.1} parent=1 // pred_region
      %v100 = vld [vmem:[#allocation2] sm:$0xff]
      %v101 = vld [vmem:[#allocation2 + $0x8] sm:$0xff]
      %v102 = vld [vmem:[%s2] sm:$0x1]
      %v104 = vperm.slane %v102, 0
      %v106 = vadd.f32 %v100, %v104
      %v107 = vadd.f32 %v101, %v104
      %108 = vst.msk [vmem:[#allocation8] sm:$0xff] %vm94, %v106
      %109 = vst.msk [vmem:[#allocation8 + $0x8] sm:$0xff] %vm94, %v107
    $region29: #{tpu_custom_call.1} parent=1 // pred_fallthru
      _
    // Predicated region
    $region30: #{tpu_custom_call.1} parent=1 // pred_check
      _
    $region31: #{tpu_custom_call.1} parent=1 // pred_check_branch
      %111 = sbr.rel (0) target = $region33
    $region32: #{tpu_custom_call.1} parent=1 // pred_region
      %113 = vsyncadd [#allocation5], 0
      %s114 = sshll.u32 [#allocation8], 4
      %s115 = int_to_ptr.vmem [resolvable:$true] %s114
      %s116 = sshll.u32 %s3, 4
      %s117 = int_to_ptr.hbm [resolvable:$true] %s116
      %122 = dma.vmem_to_hbm [thread:$0]  %s115, 256, %s117, [#allocation5], 128, 128, 8
    $region33: #{tpu_custom_call.1} parent=1 // pred_fallthru
      _
    // Predicated region
    $region34: #{tpu_custom_call.1} parent=1 // pred_check
      _
    $region35: #{tpu_custom_call.1} parent=1 // pred_check_branch
      %124 = sbr.rel (0) target = $region37
    $region36: #{tpu_custom_call.1} parent=1 // pred_region
      %126 = dma.done [#allocation5], 256
    $region37: #{tpu_custom_call.1} parent=1 // pred_fallthru
      _
    %127 = vsyncpa [#allocation4], 1
    %128 = vsyncpa [#allocation7], 1
    %129 = vsyncpa [#allocation5], 1

</llo_original>
